<compile_context>
chip_gen: v7x
topology: tpu7x:2x2x1
jax: 0.10.0
libtpu: 0.0.40
codegen_flags: <defaults>
</compile_context>

<pallas_src>
import functools
import random

import jax
import jax.numpy as jnp
from jax.experimental import pallas as pl
from jax.experimental.pallas import tpu as pltpu

_LANES = 128
_SUBLANES = 8


def _batch_drop_kernel(x_ref, o_ref, *, col_base, col_tile, c_lo, c_hi):
    """One (TB, TC) lane-dense block of the flattened (N, L*D) tensor.

    col_base / col_tile / c_lo / c_hi are Python ints baked in at trace time.
    Block columns [col0, col0+TC) intersect the dropped band [c_lo, c_hi);
    kept columns are copied through, dropped columns are written as zero.
    """
    c = pl.program_id(1)
    col0 = col_base + c * col_tile  # global flattened column of lane 0 of this block
    lane = jax.lax.broadcasted_iota(jnp.int32, (1, o_ref.shape[1]), 1)
    cols = col0 + lane                                   # (1, TC) global column ids
    keep = jnp.logical_or(cols < c_lo, cols >= c_hi)     # (1, TC), broadcasts over TB
    x = x_ref[...]
    o_ref[...] = jnp.where(keep, x, jnp.zeros_like(x))


def _pick_tiles(N, C, itemsize, batch_tile, col_tile):
    """Choose (TB, TC) tiles: sublane-legal batch tile, lane-dense column tile."""
    # batch (sublane) tile: full N for small / unaligned N, else a multiple of 8
    # chosen so the batch grid axis keeps >= 2 steps (both v7x TensorCores busy).
    if batch_tile is None:
        if N % _SUBLANES == 0 and N > _SUBLANES:
            batch_tile = max(_SUBLANES, min((N // 2) // _SUBLANES * _SUBLANES, 512))
        else:
            batch_tile = N
    batch_tile = min(batch_tile, N)
    if batch_tile < N:
        batch_tile = max(_SUBLANES, (batch_tile // _SUBLANES) * _SUBLANES)

    # column (lane) tile: multiple of 128, targeting ~2 MiB per block buffer
    # (4 live buffers with in+out double buffering fits every generation's
    # default scoped-VMEM limit, including v5e's 16 MiB and v7x's 32 MiB).
    if col_tile is None:
        target_bytes = 2 * 1024 * 1024
        col_tile = max(_LANES,
                       (target_bytes // max(batch_tile * itemsize, 1)) // _LANES * _LANES)
    if col_tile >= C:
        col_tile = C                      # full-dim block is always layout-legal
    else:
        col_tile = max(_LANES, (col_tile // _LANES) * _LANES)
    return batch_tile, col_tile


def batch_drop(x, *, batch_drop_rate, num_x, num_y, mask_start,
               batch_tile=None, col_tile=None):
    """JAX/Pallas equivalent of BatchDrop.forward (training path).

    For full HBM-traffic savings, call under jax.jit with x donated
    (donate_argnums) so the input buffer is reused in place.
    """
    if batch_drop_rate >= 1.0:
        return x

    N, L, D = x.shape
    mask_y = int(num_y * batch_drop_rate)
    if mask_y <= 0:
        return x  # empty drop band -> identity

    # dropped sequence rows (CLS token at position 0 is always kept)
    drop_start = 1 + mask_start * num_x
    drop_end = min(1 + (mask_start + mask_y) * num_x, L)  # clamp for safety
    if drop_end <= drop_start:
        return x

    # Lane-dense flattened view: (N, L, D) -> (N, L*D). The dropped band is the
    # single contiguous column range [drop_start*D, drop_end*D).
    C = L * D
    c_lo = drop_start * D
    c_hi = drop_end * D
    x2 = x.reshape(N, C)

    TB, TC = _pick_tiles(N, C, x.dtype.itemsize, batch_tile, col_tile)

    # Only visit the column tiles that intersect the dropped band; the rest of
    # the (aliased) output buffer is never touched and keeps the input bytes.
    cb0 = c_lo // TC
    cb1 = pl.cdiv(c_hi, TC)
    grid = (pl.cdiv(N, TB), cb1 - cb0)

    kernel = functools.partial(
        _batch_drop_kernel, col_base=cb0 * TC, col_tile=TC, c_lo=c_lo, c_hi=c_hi)

    out2 = pl.pallas_call(
        kernel,
        out_shape=jax.ShapeDtypeStruct((N, C), x.dtype),
        grid_spec=pl.GridSpec(
            grid=grid,
            in_specs=[pl.BlockSpec((TB, TC), lambda b, c: (b, cb0 + c))],
            out_specs=pl.BlockSpec((TB, TC), lambda b, c: (b, cb0 + c)),
        ),
        input_output_aliases={0: 0},
        compiler_params=pltpu.CompilerParams(
            dimension_semantics=("parallel", "parallel"),
        ),
    )(x2)
    return out2.reshape(N, L, D)


def _reference(x, *, batch_drop_rate, num_x, num_y, mask_start):
    """Pure-JAX reference mirroring the PyTorch forward."""
    if batch_drop_rate >= 1.0:
        return x
    N, L, D = x.shape
    mask_y = int(num_y * batch_drop_rate)
    patch_mask = jnp.ones((N, L - 1), dtype=x.dtype)
    patch_mask = patch_mask.at[:, mask_start * num_x:(mask_start + mask_y) * num_x].set(0)
    cls_mask = jnp.ones((N, 1), dtype=x.dtype)
    full_mask = jnp.concatenate([cls_mask, patch_mask], axis=1)[:, :, None]
    return x * full_mask


if __name__ == "__main__":
    # Module configuration (small, consistent with the forward: L = num_x*num_y + 1)
    batch_drop_rate = 0.5
    num_x, num_y = 4, 4          # 4x4 patch grid
    N, D = 2, 32
    L = num_x * num_y + 1        # 17 (CLS + 16 patches)

    key = jax.random.PRNGKey(0)
    x = jax.random.normal(key, (N, L, D), dtype=jnp.float32)

    # Host-level randomness for mask_start, exactly like the PyTorch module.
    random.seed(0)
    mask_y = int(num_y * batch_drop_rate)
    hi = num_y - mask_y - 1
    mask_start = random.randint(0, hi) if hi >= 0 else 0

    cfg = dict(batch_drop_rate=batch_drop_rate, num_x=num_x, num_y=num_y,
               mask_start=mask_start)
    ref = _reference(x, **cfg)

    # Default heuristic tiles (single lane-dense block per batch tile here).
    out = jax.block_until_ready(batch_drop(x, **cfg))
    assert out.shape == x.shape and out.dtype == x.dtype
    assert jnp.allclose(out, ref), "Pallas output mismatch vs reference (default tiles)"

    # Explicit 128-lane tiles: exercises the band-restricted grid + aliased,
    # partially-covered output (columns outside the band are never written).
    out2 = jax.block_until_ready(batch_drop(x, **cfg, col_tile=128))
    assert jnp.allclose(out2, ref), "Pallas output mismatch vs reference (tiled path)"

    print("KERNEL_OK")
</pallas_src>

<mosaic_0001>
module attributes {stable_mosaic.version = 11 : i64} {
  func.func @_batch_drop_kernel(%arg0: i32, %arg1: i32, %arg2: memref<2x544xf32, #tpu.memory_space<vmem>>, %arg3: memref<2x544xf32, #tpu.memory_space<vmem>>) attributes {dimension_semantics = [#tpu.dimension_semantics<parallel>, #tpu.dimension_semantics<parallel>], iteration_bounds = array<i64: 1, 1>, scalar_prefetch = 0 : i64, scratch_operands = 0 : i64, tpu.core_type = #tpu.core_type<tc>, window_params = [{transform_indices = @transform_0, window_bounds = array<i64: 2, 544>}, {transform_indices = @transform_1, window_bounds = array<i64: 2, 544>}]} {
    %c544_i32 = arith.constant 544 : i32
    %0 = arith.muli %arg1, %c544_i32 : i32
    %c0_i32 = arith.constant 0 : i32
    %1 = arith.addi %c0_i32, %0 : i32
    %2 = tpu.iota {dimensions = array<i32: 1>} : vector<1x544xi32>
    %3 = vector.broadcast %1 : i32 to vector<1x544xi32>
    %4 = arith.addi %3, %2 : vector<1x544xi32>
    %c160_i32 = arith.constant 160 : i32
    %5 = vector.broadcast %c160_i32 : i32 to vector<1x544xi32>
    %6 = arith.cmpi slt, %4, %5 : vector<1x544xi32>
    %c416_i32 = arith.constant 416 : i32
    %7 = vector.broadcast %c416_i32 : i32 to vector<1x544xi32>
    %8 = arith.cmpi sge, %4, %7 : vector<1x544xi32>
    %9 = arith.ori %6, %8 : vector<1x544xi1>
    %c0 = arith.constant 0 : index
    %c0_0 = arith.constant 0 : index
    %10 = vector.load %arg2[%c0, %c0_0] : memref<2x544xf32, #tpu.memory_space<vmem>>, vector<2x544xf32>
    %cst = arith.constant 0.000000e+00 : f32
    %11 = vector.broadcast %cst : f32 to vector<2x544xf32>
    %12 = vector.shape_cast %9 : vector<1x544xi1> to vector<1x544xi1>
    %13 = vector.broadcast %12 : vector<1x544xi1> to vector<2x544xi1>
    %14 = arith.select %13, %10, %11 : vector<2x544xi1>, vector<2x544xf32>
    %c0_1 = arith.constant 0 : index
    %c0_2 = arith.constant 0 : index
    %15 = vector.load %arg3[%c0_1, %c0_2] : memref<2x544xf32, #tpu.memory_space<vmem>>, vector<2x544xf32>
    tpu.vector_store %arg3[%c0_1, %c0_2], %14 {strides = array<i32>} : memref<2x544xf32, #tpu.memory_space<vmem>>, vector<2x544xf32>,
    return
  }
  func.func @transform_0(%arg0: i32, %arg1: i32) -> (i32, i32) {
    %c0_i32 = arith.constant 0 : i32
    %0 = arith.addi %c0_i32, %arg1 : i32
    %c0_i32_0 = arith.constant 0 : i32
    return %arg0, %0 : i32, i32
  }
  func.func @transform_1(%arg0: i32, %arg1: i32) -> (i32, i32) {
    %c0_i32 = arith.constant 0 : i32
    %0 = arith.addi %c0_i32, %arg1 : i32
    %c0_i32_0 = arith.constant 0 : i32
    return %arg0, %0 : i32, i32
  }
}

</mosaic_0001>

<llo_original>
// kernel: tpu_custom_call.1
$region0: #{tpu_custom_call.1}
  #allocation0 [shape = 'u32[]', space=smem, size = 0x4, offset = 0x4, fixed_abs, tag = 'smem constant byte address 0x4 - core index']
  #allocation1 [shape = 'u32[144,128]{1,0:T(1,128)}', space=vmem, size = 0x12000, scoped, tag = 'internal scratch']
  %s0 = inlined_call_operand.hbm [shape: f32[2,544], index: 0, kind: input, shape index: {}, may-alias: {0,1}]
  %s1 = inlined_call_operand.hbm [shape: f32[2,544], index: 1, kind: output, shape index: {}, may-alias: {0,1}]
  %s2 = sld [smem:[#allocation0]]
  $region18: #{tpu_custom_call.1} parent=0
    _
  %s4 = ssub.s32 1, %s2
  %s5 = scalar_select 0, %s4, %s2
  $region1: #{tpu_custom_call.1} parent=0
    #allocation2 [shape = 'u8[5120]{0}', space=vmem, size = 0x1400, scoped, tag = 'input window, operand 0, single buffered']
    #allocation3 [shape = 's32[1]{0}', space=sflag, size = 0x4, scoped, tag = 'scoped memory for tpu_custom_call.1']
    #allocation4 [shape = 's32[1]{0}', space=sflag, size = 0x4, scoped, tag = 'scoped memory for tpu_custom_call.1']
    #allocation5 [shape = 'u8[5120]{0}', space=vmem, size = 0x1400, scoped, tag = 'output window, operand 0, single buffered']
    %6 = vsyncpa [#allocation3], 0
    %7 = vsyncpa [#allocation4], 0
    // Predicated region
    $region2: #{tpu_custom_call.1} parent=1 // pred_check
      _
    $region3: #{tpu_custom_call.1} parent=1 // pred_check_branch
      %9 = sbr.rel (0) target = $region5
    $region4: #{tpu_custom_call.1} parent=1 // pred_region
      %s11 = ssub.s32 160, 160
      %12 = vsyncadd [#allocation3], %s11
      %s14 = sshll.u32 [#allocation2], 4
      %s15 = int_to_ptr.vmem [resolvable:$true] %s14
      %17 = dma.hbm_to_vmem [thread:$0]  %s0, 160, %s15, [#allocation3]
    $region5: #{tpu_custom_call.1} parent=1 // pred_fallthru
      _
    // Predicated region
    $region6: #{tpu_custom_call.1} parent=1 // pred_check
      _
    $region7: #{tpu_custom_call.1} parent=1 // pred_check_branch
      %19 = sbr.rel (0) target = $region9
    $region8: #{tpu_custom_call.1} parent=1 // pred_region
      %20 = dma.done [#allocation3], 160
    $region9: #{tpu_custom_call.1} parent=1 // pred_fallthru
      _
    %s21 = smul.u32 0, 544
    %v22 = vlaneseq
    %v23 = vand.u32 %v22, 127
    %v24 = vadd.s32 %v23, 128
    %v25 = vadd.s32 %v23, 256
    %v26 = vadd.s32 %v23, 384
    %v27 = vadd.s32 %v23, 512
    %v28 = vstv %s21
    %v29 = vadd.s32 %v28, %v23
    %v30 = vadd.s32 %v28, %v24
    %v31 = vadd.s32 %v28, %v25
    %v32 = vadd.s32 %v28, %v26
    %v33 = vadd.s32 %v28, %v27
    %vm34 = vcmp.lt.s32.totalorder %v29, 160
    %vm35 = vcmp.lt.s32.totalorder %v30, 160
    %vm36 = vcmp.lt.s32.totalorder %v31, 160
    %vm37 = vcmp.lt.s32.totalorder %v32, 160
    %vm38 = vcmp.lt.s32.totalorder %v33, 160
    %vm39 = vcmp.ge.s32.totalorder %v29, 416
    %vm40 = vcmp.ge.s32.totalorder %v30, 416
    %vm41 = vcmp.ge.s32.totalorder %v31, 416
    %vm42 = vcmp.ge.s32.totalorder %v32, 416
    %vm43 = vcmp.ge.s32.totalorder %v33, 416
    %vm44 = vmor %vm34, %vm39
    %vm45 = vmor %vm35, %vm40
    %vm46 = vmor %vm36, %vm41
    %vm47 = vmor %vm37, %vm42
    %vm48 = vmor %vm38, %vm43
    %v49 = vld [vmem:[#allocation2] sm:$0xff]
    %v50 = vld [vmem:[#allocation2 + $0x8] sm:$0x3]
    %v51 = vsel %vm44, 1, 0
    %v52 = vsel %vm45, 1, 0
    %v53 = vsel %vm46, 1, 0
    %v54 = vsel %vm47, 1, 0
    %v55 = vsel %vm48, 1, 0
    %vm56 = vcmp.eq.s32.totalorder %v51, 1
    %vm57 = vcmp.eq.s32.totalorder %v52, 1
    %vm58 = vcmp.eq.s32.totalorder %v53, 1
    %vm59 = vcmp.eq.s32.totalorder %v54, 1
    %vm60 = vcmp.eq.s32.totalorder %v55, 1
    %v63 = vcombine.high %v49, %v49
    %v65 = vunpack.c.l.s4 1983009808
    %v66 = vunpack.c.0.s8 %v65
    %v67 = vlaneseq
    %v68 = vshrl.u32 %v67, 7
    %v69 = vsub.s32 %v66, %v68
    %v70 = vrot.slane %v49, %v69
    %v72 = vunpack.c.l.s4 1983009808
    %v73 = vunpack.c.0.s8 %v72
    %v74 = vlaneseq
    %v75 = vshrl.u32 %v74, 7
    %v76 = vsub.s32 %v73, %v75
    %v77 = vrot.slane %v63, %v76
    %v78 = vcombine.high %v70, %v70
    %v79 = vcombine.high %v77, %v77
    %v81 = vunpack.c.l.s4 1983009808
    %v82 = vunpack.c.0.s8 %v81
    %v83 = vlaneseq
    %v84 = vshrl.u32 %v83, 7
    %v85 = vsub.s32 %v82, %v84
    %v86 = vrot.slane %v50, %v85
    %v92 = vsel %vm56, %v70, 0.0
    %v93 = vsel %vm57, %v78, 0.0
    %v94 = vsel %vm58, %v77, 0.0
    %v95 = vsel %vm59, %v79, 0.0
    %v96 = vsel %vm60, %v86, 0.0
    %v102 = vcombine.low %v92, %v93
    %v103 = vcombine.low %v94, %v95
    %v105 = vunpack.c.l.s4 1983009808
    %v106 = vunpack.c.0.s8 %v105
    %v107 = vlaneseq
    %v108 = vshrl.u32 %v107, 7
    %v109 = vsub.s32 %v106, %v108
    %v110 = vrot.slane %v102, %v109
    %v112 = vunpack.c.l.s4 1983009808
    %v113 = vunpack.c.0.s8 %v112
    %v114 = vlaneseq
    %v115 = vshrl.u32 %v114, 7
    %v116 = vsub.s32 %v113, %v115
    %v117 = vrot.slane %v103, %v116
    %v118 = vcombine.low %v110, %v117
    %v120 = vunpack.c.l.s4 1983009808
    %v121 = vunpack.c.0.s8 %v120
    %v122 = vlaneseq
    %v123 = vshrl.u32 %v122, 7
    %v124 = vsub.s32 %v121, %v123
    %v125 = vrot.slane %v96, %v124
    %128 = vst [vmem:[#allocation5] sm:$0xff] %v118
    %vm129 = vcmask 254976
    %130 = vst.msk [vmem:[#allocation5 + $0x8] sm:$0x3] %vm129, %v125
    // Predicated region
    $region10: #{tpu_custom_call.1} parent=1 // pred_check
      _
    $region11: #{tpu_custom_call.1} parent=1 // pred_check_branch
      %132 = sbr.rel (0) target = $region13
    $region12: #{tpu_custom_call.1} parent=1 // pred_region
      %s134 = ssub.s32 160, 160
      %135 = vsyncadd [#allocation4], %s134
      %s137 = sshll.u32 [#allocation5], 4
      %s138 = int_to_ptr.vmem [resolvable:$true] %s137
      %140 = dma.vmem_to_hbm [thread:$0]  %s138, 160, %s1, [#allocation4]
    $region13: #{tpu_custom_call.1} parent=1 // pred_fallthru
      _
    // Predicated region
    $region14: #{tpu_custom_call.1} parent=1 // pred_check
      _
    $region15: #{tpu_custom_call.1} parent=1 // pred_check_branch
      %142 = sbr.rel (0) target = $region17
    $region16: #{tpu_custom_call.1} parent=1 // pred_region
      %143 = dma.done [#allocation4], 160
    $region17: #{tpu_custom_call.1} parent=1 // pred_fallthru
      _
    %144 = vsyncpa [#allocation3], 1
    %145 = vsyncpa [#allocation4], 1

</llo_original>
